<compile_context>
chip_gen: v6e
topology: v6e:2x2x1
jax: 0.10.0
libtpu: 0.0.40
codegen_flags: <defaults>
</compile_context>

<pallas_src>
import jax
import jax.numpy as jnp
from jax.experimental import pallas as pl
from jax.experimental.pallas import tpu as pltpu


def _linear_kernel(x_ref, w_ref, b_ref, o_ref):
    # One batch tile per grid step; whole tile matmul on the MXU with an f32
    # accumulator, f32 bias broadcast, cast only on the final store.
    acc = jnp.dot(x_ref[...], w_ref[...], preferred_element_type=jnp.float32)
    acc = acc + b_ref[...]                      # (TB, N) + (1, N) broadcast, f32
    o_ref[...] = acc.astype(o_ref.dtype)


def _pick_batch_tile(B, H, itemsize, requested=None):
    """Pick a batch tile: big enough to hit HBM roofline, small enough for VMEM."""
    # Sublane packing: 8 rows for 4-byte dtypes, 16 for 2-byte dtypes.
    sublane = max(8, 32 // itemsize)
    if requested is None:
        # Keep the double-buffered X tiles within ~16 MiB so 2x X tile + W + b
        # + 2x out tile fit comfortably in a 32 MiB scoped-VMEM budget on every
        # generation (v5e 16 MiB default raised, v6e/v7x 32 MiB default).
        budget = 16 * 1024 * 1024
        tb = budget // max(1, 2 * H * itemsize)
        tb = min(2048, tb)
    else:
        tb = requested
    if B <= tb:
        return B  # single block covering the whole (small) batch: full-dim exemption
    return max(sublane, (tb // sublane) * sublane)


def text_classification_head_forward(x, w, b, *, compute_dtype=None,
                                     batch_tile=None, pad_out_lanes=True):
    """logits = x @ w + b   (x: [B, H], w: [H, N], b: [1, N]) -> [B, N]

    compute_dtype: optionally stream x/w in a narrower dtype (e.g. bf16) to
    halve HBM traffic; bias add and accumulation stay in f32, output keeps the
    original x dtype.
    pad_out_lanes: zero-pad the (typically tiny) num_labels axis up to a
    multiple of 128 so stores are lane-dense; padded columns are sliced off.
    """
    B, H = x.shape
    H2, N = w.shape
    assert H == H2 and b.shape == (1, N)
    out_dtype = x.dtype
    n_orig = N

    if compute_dtype is not None:
        x = x.astype(compute_dtype)
        w = w.astype(compute_dtype)
    b = b.astype(jnp.float32)  # bias / accumulation always in f32

    if pad_out_lanes and (N % 128) != 0:
        n_pad = ((N + 127) // 128) * 128 - N
        w = jnp.pad(w, ((0, 0), (0, n_pad)))   # zero weights -> zero logits
        b = jnp.pad(b, ((0, 0), (0, n_pad)))   # zero bias for padded labels
        N = N + n_pad

    itemsize = jnp.dtype(x.dtype).itemsize
    tb = _pick_batch_tile(B, H, itemsize, batch_tile)
    grid = (pl.cdiv(B, tb),)

    cost = pl.CostEstimate(
        flops=2 * B * H * N,
        transcendentals=0,
        bytes_accessed=(B * H * itemsize + H * N * itemsize
                        + N * 4 + B * N * jnp.dtype(out_dtype).itemsize),
    )

    out = pl.pallas_call(
        _linear_kernel,
        out_shape=jax.ShapeDtypeStruct((B, N), out_dtype),
        grid_spec=pltpu.PrefetchScalarGridSpec(
            num_scalar_prefetch=0,
            grid=grid,
            in_specs=[
                pl.BlockSpec((tb, H), lambda i: (i, 0)),   # stream X batch tiles (double-buffered)
                pl.BlockSpec((H, N), lambda i: (0, 0)),    # W: DMA once, resident across tiles
                pl.BlockSpec((1, N), lambda i: (0, 0)),    # bias: resident across tiles
            ],
            out_specs=pl.BlockSpec((tb, N), lambda i: (i, 0)),
        ),
        compiler_params=pltpu.CompilerParams(
            # batch tiles are independent -> "parallel" shards them across
            # v7x's 2 TensorCores; harmless on v5e/v6e.
            dimension_semantics=("parallel",),
            vmem_limit_bytes=32 * 1024 * 1024,
        ),
        cost_estimate=cost,
    )(x, w, b)

    if N != n_orig:
        out = out[:, :n_orig]
    return out


def init_params(key, hidden, num_labels, dtype=jnp.float32):
    # Deterministic synthetic init mirroring nn.Linear(hidden, num_labels):
    # weight (num_labels, hidden) stored transposed as (hidden, num_labels),
    # bias (num_labels,) stored as (1, num_labels).
    k_w, k_b = jax.random.split(key)
    bound = 1.0 / (hidden ** 0.5)
    w = jax.random.uniform(k_w, (hidden, num_labels), dtype, -bound, bound)
    b = jax.random.uniform(k_b, (1, num_labels), dtype, -bound, bound)
    return w, b


# TODO(synk): logits_to_loss / logits_to_preds / logits_to_probs (CrossEntropyLoss,
# argmax->label strings, softmax on host) are training/inference utilities, not the
# forward pass, and are left out of the kernel.

if __name__ == "__main__":
    key = jax.random.PRNGKey(0)
    k_x, k_p, k_x2 = jax.random.split(key, 3)

    batch, hidden, num_labels = 8, 32, 4  # layer_dims = [32, 4]
    x = jax.random.normal(k_x, (batch, hidden), dtype=jnp.float32)
    w, b = init_params(k_p, hidden, num_labels)
    ref = x @ w + b

    # Default path: lane-padded output (unmasked vst), single batch tile.
    logits = text_classification_head_forward(x, w, b)
    jax.block_until_ready(logits)
    assert logits.shape == (batch, num_labels)
    assert jnp.allclose(logits, ref, atol=1e-4, rtol=1e-4)

    # Unpadded path (exercise the narrow-output kernel variant).
    logits_np = text_classification_head_forward(x, w, b, pad_out_lanes=False)
    jax.block_until_ready(logits_np)
    assert logits_np.shape == (batch, num_labels)
    assert jnp.allclose(logits_np, ref, atol=1e-4, rtol=1e-4)

    # Multi-tile path: forces grid > 1 plus a masked partial last batch block.
    batch2 = 40
    x2 = jax.random.normal(k_x2, (batch2, hidden), dtype=jnp.float32)
    logits2 = text_classification_head_forward(x2, w, b, batch_tile=16)
    jax.block_until_ready(logits2)
    ref2 = x2 @ w + b
    assert logits2.shape == (batch2, num_labels)
    assert jnp.allclose(logits2, ref2, atol=1e-4, rtol=1e-4)

    # bf16-streaming path (halves HBM bytes; f32 bias/accumulation keeps accuracy).
    logits_bf16 = text_classification_head_forward(x, w, b, compute_dtype=jnp.bfloat16)
    jax.block_until_ready(logits_bf16)
    assert logits_bf16.dtype == jnp.float32
    assert jnp.allclose(logits_bf16, ref, atol=5e-2, rtol=5e-2)

    print("KERNEL_OK")
</pallas_src>

<mosaic_0001>
module attributes {stable_mosaic.version = 11 : i64} {
  func.func @_linear_kernel(%arg0: i32, %arg1: memref<8x32xf32, #tpu.memory_space<vmem>>, %arg2: memref<32x128xf32, #tpu.memory_space<vmem>>, %arg3: memref<1x128xf32, #tpu.memory_space<vmem>>, %arg4: memref<8x128xf32, #tpu.memory_space<vmem>>) attributes {dimension_semantics = [#tpu.dimension_semantics<parallel>], iteration_bounds = array<i64: 1>, scalar_prefetch = 0 : i64, scratch_operands = 0 : i64, tpu.core_type = #tpu.core_type<tc>, window_params = [{transform_indices = @transform_0, window_bounds = array<i64: 8, 32>}, {pipeline_mode = #tpu.pipeline_mode<synchronous>, transform_indices = @transform_1, window_bounds = array<i64: 32, 128>}, {pipeline_mode = #tpu.pipeline_mode<synchronous>, transform_indices = @transform_2, window_bounds = array<i64: 1, 128>}, {transform_indices = @transform_3, window_bounds = array<i64: 8, 128>}]} {
    %c0 = arith.constant 0 : index
    %c0_0 = arith.constant 0 : index
    %0 = vector.load %arg1[%c0, %c0_0] : memref<8x32xf32, #tpu.memory_space<vmem>>, vector<8x32xf32>
    %c0_1 = arith.constant 0 : index
    %c0_2 = arith.constant 0 : index
    %1 = vector.load %arg2[%c0_1, %c0_2] : memref<32x128xf32, #tpu.memory_space<vmem>>, vector<32x128xf32>
    %cst = arith.constant dense<0.000000e+00> : vector<8x128xf32>
    %2 = tpu.matmul %0, %1, %cst {dimension_numbers = #tpu.dot_dimension_numbers<[1], [0], [0], [1], [0, 0, 1, 1], [], []>} : vector<8x32xf32>, vector<32x128xf32>, vector<8x128xf32> -> vector<8x128xf32>
    %c0_3 = arith.constant 0 : index
    %c0_4 = arith.constant 0 : index
    %3 = vector.load %arg3[%c0_3, %c0_4] : memref<1x128xf32, #tpu.memory_space<vmem>>, vector<1x128xf32>
    %4 = vector.broadcast %3 : vector<1x128xf32> to vector<8x128xf32>
    %5 = arith.addf %2, %4 : vector<8x128xf32>
    %c0_5 = arith.constant 0 : index
    %c0_6 = arith.constant 0 : index
    %6 = vector.load %arg4[%c0_5, %c0_6] : memref<8x128xf32, #tpu.memory_space<vmem>>, vector<8x128xf32>
    tpu.vector_store %arg4[%c0_5, %c0_6], %5 {strides = array<i32>} : memref<8x128xf32, #tpu.memory_space<vmem>>, vector<8x128xf32>,
    return
  }
  func.func @transform_0(%arg0: i32) -> (i32, i32) {
    %c0_i32 = arith.constant 0 : i32
    %c0_i32_0 = arith.constant 0 : i32
    return %arg0, %c0_i32 : i32, i32
  }
  func.func @transform_1(%arg0: i32) -> (i32, i32) {
    %c0_i32 = arith.constant 0 : i32
    %c0_i32_0 = arith.constant 0 : i32
    %c0_i32_1 = arith.constant 0 : i32
    return %c0_i32, %c0_i32_0 : i32, i32
  }
  func.func @transform_2(%arg0: i32) -> (i32, i32) {
    %c0_i32 = arith.constant 0 : i32
    %c0_i32_0 = arith.constant 0 : i32
    %c0_i32_1 = arith.constant 0 : i32
    return %c0_i32, %c0_i32_0 : i32, i32
  }
  func.func @transform_3(%arg0: i32) -> (i32, i32) {
    %c0_i32 = arith.constant 0 : i32
    %c0_i32_0 = arith.constant 0 : i32
    return %arg0, %c0_i32 : i32, i32
  }
}

</mosaic_0001>

<llo_original>
// kernel: tpu_custom_call.1
$region0: #{tpu_custom_call.1}
  #allocation0 [shape = 'u32[]', space=smem, size = 0x4, offset = 0x4, fixed_abs, tag = 'smem constant byte address 0x4 - core index']
  #allocation1 [shape = 'u32[144,128]{1,0:T(1,128)}', space=vmem, size = 0x12000, scoped, tag = 'internal scratch']
  %s0 = inlined_call_operand.hbm [shape: f32[8,32], index: 0, kind: input, shape index: {}]
  %s1 = inlined_call_operand.hbm [shape: f32[32,128], index: 1, kind: input, shape index: {}]
  %s2 = inlined_call_operand.vmem [shape: f32[1,128], index: 2, kind: input, shape index: {}]
  %s3 = inlined_call_operand.hbm [shape: f32[8,128], index: 3, kind: output, shape index: {}]
  %s4 = sld [smem:[#allocation0]]
  $region30: #{tpu_custom_call.1} parent=0
    _
  %s6 = ssub.s32 1, %s4
  %s7 = scalar_select 0, %s6, %s4
  $region1: #{tpu_custom_call.1} parent=0
    #allocation2 [shape = 'u8[4096]{0}', space=vmem, size = 0x1000, scoped, tag = 'input window, operand 0, single buffered']
    #allocation3 [shape = 's32[1]{0}', space=sflag, size = 0x4, scoped, tag = 'scoped memory for tpu_custom_call.1']
    #allocation4 [shape = 's32[1]{0}', space=sflag, size = 0x4, scoped, tag = 'scoped memory for tpu_custom_call.1']
    #allocation5 [shape = 'u8[16384]{0}', space=vmem, size = 0x4000, scoped, tag = 'input window, operand 1, single buffered']
    #allocation6 [shape = 's32[1]{0}', space=sflag, size = 0x4, scoped, tag = 'scoped memory for tpu_custom_call.1']
    #allocation7 [shape = 'u8[4096]{0}', space=vmem, size = 0x1000, scoped, tag = 'output window, operand 0, single buffered']
    %8 = vsyncpa [#allocation3], 0
    %9 = vsyncpa [#allocation6], 0
    %10 = vsyncpa [#allocation4], 0
    // Predicated region
    $region2: #{tpu_custom_call.1} parent=1 // pred_check
      _
    $region3: #{tpu_custom_call.1} parent=1 // pred_check_branch
      %12 = sbr.rel (0) target = $region5
    $region4: #{tpu_custom_call.1} parent=1 // pred_region
      %s14 = ssub.s32 128, 128
      %15 = vsyncadd [#allocation3], %s14
      %s17 = sshll.u32 [#allocation2], 4
      %s18 = int_to_ptr.vmem [resolvable:$true] %s17
      %20 = dma.hbm_to_vmem [thread:$0]  %s0, 128, %s18, [#allocation3]
    $region5: #{tpu_custom_call.1} parent=1 // pred_fallthru
      _
    // Predicated region
    $region6: #{tpu_custom_call.1} parent=1 // pred_check
      _
    $region7: #{tpu_custom_call.1} parent=1 // pred_check_branch
      %22 = sbr.rel (0) target = $region9
    $region8: #{tpu_custom_call.1} parent=1 // pred_region
      %s24 = ssub.s32 512, 512
      %25 = vsyncadd [#allocation6], %s24
      %s26 = sshll.u32 [#allocation5], 4
      %s27 = int_to_ptr.vmem [resolvable:$true] %s26
      %32 = dma.hbm_to_vmem [thread:$0]  %s1, 512, %s27, [#allocation6], 128, 128, 8
    $region9: #{tpu_custom_call.1} parent=1 // pred_fallthru
      _
    // Predicated region
    $region10: #{tpu_custom_call.1} parent=1 // pred_check
      _
    $region11: #{tpu_custom_call.1} parent=1 // pred_check_branch
      %34 = sbr.rel (0) target = $region13
    $region12: #{tpu_custom_call.1} parent=1 // pred_region
      _
    $region13: #{tpu_custom_call.1} parent=1 // pred_fallthru
      _
    // Predicated region
    $region14: #{tpu_custom_call.1} parent=1 // pred_check
      _
    $region15: #{tpu_custom_call.1} parent=1 // pred_check_branch
      %36 = sbr.rel (0) target = $region17
    $region16: #{tpu_custom_call.1} parent=1 // pred_region
      %37 = dma.done [#allocation3], 128
    $region17: #{tpu_custom_call.1} parent=1 // pred_fallthru
      _
    // Predicated region
    $region18: #{tpu_custom_call.1} parent=1 // pred_check
      _
    $region19: #{tpu_custom_call.1} parent=1 // pred_check_branch
      %39 = sbr.rel (0) target = $region21
    $region20: #{tpu_custom_call.1} parent=1 // pred_region
      %40 = dma.done [#allocation6], 512
    $region21: #{tpu_custom_call.1} parent=1 // pred_fallthru
      _
    %v41 = vld [vmem:[#allocation2] sm:$0xff]
    %v42 = vld [vmem:[#allocation5] sm:$0xff]
    %v43 = vld [vmem:[#allocation5 + $0x8] sm:$0xff]
    %v44 = vld [vmem:[#allocation5 + $0x10] sm:$0xff]
    %v45 = vld [vmem:[#allocation5 + $0x18] sm:$0xff]
    %v46 = vld [vmem:[%s2] sm:$0x1]
    %v48 = vlaneseq
    %v49 = vshrl.u32 %v48, 7
    %v50 = vsub.s32 0, %v49
    %v51 = vrot.slane %v46, %v50
    %vm53 = vcmask 261120
    %v55 = vsel %vm53, %v41, 0
    %57 = vmatprep.subr.mxu0 0.0
    %58 = vmatpush1.msra.mxu0 0.0
    %59 = vmatprep.subr.mxu0 0.0
    %60 = vmatpush1.msra.mxu0 0.0
    %61 = vmatprep.subr.mxu0 0.0
    %62 = vmatpush1.msra.mxu0 0.0
    %63 = vmatprep.subr.mxu0 0.0
    %64 = vmatpush1.msra.mxu0 0.0
    %65 = vmatprep.subr.mxu0 0.0
    %66 = vmatpush1.msra.mxu0 0.0
    %67 = vmatprep.subr.mxu0 0.0
    %68 = vmatpush1.msra.mxu0 0.0
    %69 = vmatprep.subr.mxu0 0.0
    %70 = vmatpush1.msra.mxu0 0.0
    %71 = vmatprep.subr.mxu0 0.0
    %72 = vmatpush1.msra.mxu0 0.0
    %73 = vmatprep.subr.mxu0 0.0
    %74 = vmatpush1.msra.mxu0 0.0
    %75 = vmatprep.subr.mxu0 0.0
    %76 = vmatpush1.msra.mxu0 0.0
    %77 = vmatprep.subr.mxu0 0.0
    %78 = vmatpush1.msra.mxu0 0.0
    %79 = vmatprep.subr.mxu0 0.0
    %80 = vmatpush1.msra.mxu0 0.0
    %81 = vmatprep.subr.mxu0 0.0
    %82 = vmatpush1.msra.mxu0 %v45
    %83 = vmatprep.subr.mxu0 0.0
    %84 = vmatpush1.msra.mxu0 %v44
    %85 = vmatprep.subr.mxu0 0.0
    %86 = vmatpush1.msra.mxu0 %v43
    %87 = vmatprep.subr.mxu0 0.0
    %88 = vmatpush1.msra.mxu0 %v42
    %89 = vmatprep.subr.mxu0 0.0
    %90 = vmatpush2.msra.mxu0 0.0
    %91 = vmatprep.subr.mxu0 0.0
    %92 = vmatpush2.msra.mxu0 0.0
    %93 = vmatprep.subr.mxu0 0.0
    %94 = vmatpush2.msra.mxu0 0.0
    %95 = vmatprep.subr.mxu0 0.0
    %96 = vmatpush2.msra.mxu0 0.0
    %97 = vmatprep.subr.mxu0 0.0
    %98 = vmatpush2.msra.mxu0 0.0
    %99 = vmatprep.subr.mxu0 0.0
    %100 = vmatpush2.msra.mxu0 0.0
    %101 = vmatprep.subr.mxu0 0.0
    %102 = vmatpush2.msra.mxu0 0.0
    %103 = vmatprep.subr.mxu0 0.0
    %104 = vmatpush2.msra.mxu0 0.0
    %105 = vmatprep.subr.mxu0 0.0
    %106 = vmatpush2.msra.mxu0 0.0
    %107 = vmatprep.subr.mxu0 0.0
    %108 = vmatpush2.msra.mxu0 0.0
    %109 = vmatprep.subr.mxu0 0.0
    %110 = vmatpush2.msra.mxu0 0.0
    %111 = vmatprep.subr.mxu0 0.0
    %112 = vmatpush2.msra.mxu0 0.0
    %113 = vmatprep.subr.mxu0 0.0
    %114 = vmatpush2.msra.mxu0 0.0
    %115 = vmatprep.subr.mxu0 0.0
    %116 = vmatpush2.msra.mxu0 0.0
    %117 = vmatprep.subr.mxu0 0.0
    %118 = vmatpush2.msra.mxu0 0.0
    %119 = vmatprep.subr.mxu0 0.0
    %120 = vmatpush2.msra.mxu0 0.0
    %121 = vmatprep.mubr.f32.mxu0 0.0
    %122 = vmatmul.mubr.f32.gmra.mxu0 %v55
    %v123 = vpop.f32.mrf.mxu0
    %v124 = vadd.f32 %v51, %v123
    %v125 = vpop.f32.mrf.mxu0
    %126 = vdwg.mxu0
    %127 = vst [vmem:[#allocation7] sm:$0xff] %v124
    // Predicated region
    $region22: #{tpu_custom_call.1} parent=1 // pred_check
      _
    $region23: #{tpu_custom_call.1} parent=1 // pred_check_branch
      %129 = sbr.rel (0) target = $region25
    $region24: #{tpu_custom_call.1} parent=1 // pred_region
      %s131 = ssub.s32 128, 128
      %132 = vsyncadd [#allocation4], %s131
      %s134 = sshll.u32 [#allocation7], 4
      %s135 = int_to_ptr.vmem [resolvable:$true] %s134
      %137 = dma.vmem_to_hbm [thread:$0]  %s135, 128, %s3, [#allocation4]
    $region25: #{tpu_custom_call.1} parent=1 // pred_fallthru
      _
    // Predicated region
    $region26: #{tpu_custom_call.1} parent=1 // pred_check
      _
    $region27: #{tpu_custom_call.1} parent=1 // pred_check_branch
      %139 = sbr.rel (0) target = $region29
    $region28: #{tpu_custom_call.1} parent=1 // pred_region
      %140 = dma.done [#allocation4], 128
    $region29: #{tpu_custom_call.1} parent=1 // pred_fallthru
      _
    %141 = vsyncpa [#allocation3], 1
    %142 = vsyncpa [#allocation6], 1
    %143 = vsyncpa [#allocation4], 1

</llo_original>
